<compile_context>
chip_gen: v7x
topology: tpu7x:2x2x1
jax: 0.10.0
libtpu: 0.0.40
codegen_flags: <defaults>
</compile_context>

<pallas_src>
import jax
import jax.numpy as jnp
from jax.experimental import pallas as pl
from jax.experimental.pallas import tpu as pltpu


_MASK_NEG = 1e30  # additive mask sentinel; must stay in f32 softmax math


def _softmax(x, axis):
    """Numerically stable softmax; divide via approx reciprocal on the EUP."""
    m = jnp.max(x, axis=axis, keepdims=True)
    e = jnp.exp(x - m)
    denom = jnp.sum(e, axis=axis, keepdims=True)
    return e * pl.reciprocal(denom, approx=True)


def bidaf_kernel(text_ref, mod_ref, tbias_ref, mbias_ref,
                 tw_ref, mw_ref, tmw_ref, bias_ref, out_ref):
    f32 = jnp.float32
    bf16 = jnp.bfloat16
    H = text_ref.shape[-1]

    text = text_ref[...]               # (Bb, T, H)  native dtype
    text_f32 = text.astype(f32)
    mod_bf = mod_ref[...].astype(bf16)  # (Bb, M, H)  bf16 for the MXU
    tbias = tbias_ref[...]             # (Bb, T, 1)  f32 additive mask bias
    mbias = mbias_ref[...]             # (Bb, 1, M)  f32 additive mask bias
    tw = tw_ref[...].astype(f32)       # (1, H)  text_weight^T
    mw = mw_ref[...].astype(f32)       # (1, H)  modality_weight^T
    tmw = tmw_ref[...].astype(f32)     # (1, H)  text_modality_weight
    bias = bias_ref[0, 0]              # scalar (SMEM)

    # --- similarity matrix (Eq. 1), s: (Bb, T, M), f32 accumulation ---
    # s0 = text @ text_weight is a VPU reduce; s1 = modality @ modality_weight
    # is folded into the main matmul by adding mw to the lhs rows.
    s0 = jnp.sum(text_f32 * tw, axis=-1, keepdims=True)              # (Bb, T, 1)
    lhs = (text_f32 * tmw + mw).astype(bf16)                         # (Bb, T, H)
    s = jnp.einsum('bth,bmh->btm', lhs, mod_bf,
                   preferred_element_type=f32)                       # (Bb, T, M)
    s = s + (s0 + bias)

    # --- masked softmaxes: additive bias (single VPU add), f32 math ---
    p1 = _softmax(s + mbias, axis=-1)   # text -> modality (over M)
    p2 = _softmax(s + tbias, axis=1)    # modality -> text (over T)

    # --- attended vectors (bf16 operands, f32 accumulation) ---
    a = jnp.einsum('btm,bmh->bth', p1.astype(bf16), mod_bf,
                   preferred_element_type=f32)                       # (Bb, T, H)
    # Reassociated: b = p1 @ (p2^T @ text) -> no (T, T) intermediate.
    # NOTE: the contraction for `c` is over the sublane (T) axis of both
    # operands; if the Mosaic dump shows a redundant vxpose here, make the
    # transpose explicit once instead of per-operand.
    c = jnp.einsum('btm,bth->bmh', p2.astype(bf16), text.astype(bf16),
                   preferred_element_type=f32)                       # (Bb, M, H)
    b = jnp.einsum('btm,bmh->bth', p1.astype(bf16), c.astype(bf16),
                   preferred_element_type=f32)                       # (Bb, T, H)

    # --- epilogue: [text, a, text*a, text*b], products fused into the stores ---
    od = out_ref.dtype
    if H % 128 == 0:
        # Lane-aligned segments: store directly, skip the concat temporary.
        out_ref[:, :, 0:H] = text.astype(od)
        out_ref[:, :, H:2 * H] = a.astype(od)
        out_ref[:, :, 2 * H:3 * H] = (text_f32 * a).astype(od)
        out_ref[:, :, 3 * H:4 * H] = (text_f32 * b).astype(od)
    else:
        out_ref[...] = jnp.concatenate(
            [text_f32, a, text_f32 * a, text_f32 * b], axis=-1).astype(od)


def _tpu_vmem_and_cores():
    """Best-effort (vmem_capacity_bytes, tensorcores_per_chip, is_v7)."""
    vmem = 128 * 1024 * 1024
    kind = ""
    try:
        vmem = int(pltpu.get_tpu_info().vmem_capacity_bytes)
    except Exception:
        pass
    try:
        kind = jax.devices()[0].device_kind.lower()
    except Exception:
        pass
    is_v7 = "v7" in kind
    ntc = 2 if (is_v7 or vmem <= 64 * 1024 * 1024) else 1
    return vmem, ntc, is_v7


def _budgets(vmem, is_v7):
    """(per-step block budget, vmem_limit_bytes) by TPU generation."""
    if is_v7 or vmem <= 64 * 1024 * 1024:
        # v7x: 64 MiB VMEM per TensorCore -> keep pipelining headroom.
        return 5 * 1024 * 1024, 40 * 1024 * 1024
    # v5e / v6e: 128 MiB physical VMEM (default scoped limit 16 / 32 MiB).
    limit = min(96 * 1024 * 1024, max(32 * 1024 * 1024, (vmem * 3) // 4))
    return 16 * 1024 * 1024, limit


def _per_batch_bytes(T, M, H, itemsize):
    """VMEM bytes per batch element: 2x-buffered pipelined blocks + in-kernel
    f32/bf16 intermediates (text_f32/s/p1/p2/a/b/c + bf16 matmul copies)."""
    io = 2 * (5 * T * H + M * H + T + M) * itemsize      # double-buffered blocks
    f32_tmp = (4 * T * H + 3 * T * M + M * H) * 4        # f32 intermediates
    bf16_tmp = (2 * T * H + 2 * T * M + M * H) * 2       # bf16 operand copies
    return io + f32_tmp + bf16_tmp


def _choose_block_b(B, per_b_bytes, budget_bytes, num_tc):
    """Batch elements per grid step: amortize ~0.35us/step overhead while
    staying inside the VMEM budget.  Only 2-TC chips (v7x) reserve >= num_tc
    grid steps for megacore; single-TC chips take the largest block."""
    max_bb = max(1, min(B, budget_bytes // max(per_b_bytes, 1)))
    if num_tc >= 2 and B >= num_tc:
        max_bb = max(1, min(max_bb, B // num_tc))
    bb = 1
    for d in range(1, max_bb + 1):              # largest divisor of B <= max_bb
        if B % d == 0:
            bb = d
    return bb


@jax.jit
def bidaf_attention(text, modality, text_mask, modality_mask,
                    text_weight, modality_weight, text_modality_weight, bias):
    B, T, H = text.shape
    M = modality.shape[1]
    dtype = text.dtype   # output keeps the input dtype

    # Additive mask biases: 0 where valid, -1e30 where padded.
    tbias3 = (text_mask.reshape(B, T, 1).astype(jnp.float32) - 1.0) * _MASK_NEG
    mbias3 = (modality_mask.reshape(B, 1, M).astype(jnp.float32) - 1.0) * _MASK_NEG

    tw = text_weight.reshape(1, H).astype(jnp.float32)
    mw = modality_weight.reshape(1, H).astype(jnp.float32)
    tmw = text_modality_weight.reshape(1, H).astype(jnp.float32)
    b2 = bias.reshape(1, 1).astype(jnp.float32)

    vmem, ntc, is_v7 = _tpu_vmem_and_cores()
    budget, vmem_limit = _budgets(vmem, is_v7)
    per_b = _per_batch_bytes(T, M, H, jnp.dtype(dtype).itemsize)
    bb = _choose_block_b(B, per_b, budget, ntc)
    grid = (B // bb,)

    return pl.pallas_call(
        bidaf_kernel,
        out_shape=jax.ShapeDtypeStruct((B, T, 4 * H), dtype),
        grid_spec=pltpu.PrefetchScalarGridSpec(
            num_scalar_prefetch=0,
            grid=grid,
            in_specs=[
                pl.BlockSpec((bb, T, H), lambda i: (i, 0, 0)),      # text
                pl.BlockSpec((bb, M, H), lambda i: (i, 0, 0)),      # modality
                pl.BlockSpec((bb, T, 1), lambda i: (i, 0, 0)),      # text mask bias
                pl.BlockSpec((bb, 1, M), lambda i: (i, 0, 0)),      # modality mask bias
                pl.BlockSpec((1, H), lambda i: (0, 0)),             # text_weight^T
                pl.BlockSpec((1, H), lambda i: (0, 0)),             # modality_weight^T
                pl.BlockSpec((1, H), lambda i: (0, 0)),             # text_modality_weight
                pl.BlockSpec(memory_space=pltpu.MemorySpace.SMEM),  # bias scalar
            ],
            out_specs=pl.BlockSpec((bb, T, 4 * H), lambda i: (i, 0, 0)),
        ),
        compiler_params=pltpu.CompilerParams(
            dimension_semantics=("parallel",),
            vmem_limit_bytes=vmem_limit,
        ),
    )(text, modality, tbias3, mbias3, tw, mw, tmw, b2)


def reference(text, modality, text_mask, modality_mask, tw, mw, tmw, bias):
    """Pure-JAX f32 reference mirroring the PyTorch forward (eval mode)."""
    B, T, H = text.shape
    M = modality.shape[1]
    s0 = text @ tw                                    # (B, T, 1)
    s1 = jnp.swapaxes(modality @ mw, 1, 2)            # (B, 1, M)
    s2 = (text * tmw) @ jnp.swapaxes(modality, 1, 2)  # (B, T, M)
    s = s0 + s1 + s2 + bias
    mm = modality_mask.astype(jnp.float32).reshape(B, 1, M)
    tm = text_mask.astype(jnp.float32).reshape(B, T, 1)
    p1 = jax.nn.softmax(mm * s + (1 - mm) * -1e30, axis=2)
    p2 = jax.nn.softmax(tm * s + (1 - tm) * -1e30, axis=1)
    a = p1 @ modality
    b = (p1 @ jnp.swapaxes(p2, 1, 2)) @ text
    return jnp.concatenate([text, a, text * a, text * b], axis=2)


if __name__ == "__main__":
    B, T, M, H = 2, 8, 16, 32

    key = jax.random.PRNGKey(0)
    k_text, k_mod, k_tw, k_mw, k_tmw = jax.random.split(key, 5)

    text = jax.random.normal(k_text, (B, T, H), dtype=jnp.float32)
    modality = jax.random.normal(k_mod, (B, M, H), dtype=jnp.float32)

    # Deterministic masks (1 = valid position, 0 = padded).
    t_lens = jnp.array([T, 5])
    m_lens = jnp.array([M, 12])
    text_mask = (jnp.arange(T)[None, :] < t_lens[:, None]).astype(jnp.float32)
    modality_mask = (jnp.arange(M)[None, :] < m_lens[:, None]).astype(jnp.float32)

    # Xavier-uniform-style deterministic parameter init.
    bound_w = (6.0 / (H + 1)) ** 0.5          # weights of shape (H, 1)
    bound_tmw = (6.0 / (2 * H)) ** 0.5        # weight of shape (1, 1, H)
    text_weight = jax.random.uniform(k_tw, (H, 1), minval=-bound_w, maxval=bound_w)
    modality_weight = jax.random.uniform(k_mw, (H, 1), minval=-bound_w, maxval=bound_w)
    text_modality_weight = jax.random.uniform(
        k_tmw, (1, 1, H), minval=-bound_tmw, maxval=bound_tmw)
    bias = jnp.zeros((1,), dtype=jnp.float32)

    out = bidaf_attention(text, modality, text_mask, modality_mask,
                          text_weight, modality_weight, text_modality_weight, bias)
    out = jax.block_until_ready(out)

    ref = reference(text, modality, text_mask, modality_mask,
                    text_weight, modality_weight, text_modality_weight, bias)

    assert out.shape == (B, T, 4 * H), out.shape
    # First H lanes are a pure passthrough of `text` -> must match exactly
    # (checks output layout / block indexing).
    assert jnp.allclose(out[..., :H], text, atol=1e-6)
    # Attended blocks run through bf16 MXU operands (f32 accumulation) and an
    # approx-reciprocal softmax; compare with a scale-relative tolerance.
    scale = float(jnp.maximum(1.0, jnp.max(jnp.abs(ref))))
    max_err = float(jnp.max(jnp.abs(out - ref)) / scale)
    assert max_err < 5e-2, max_err

    print("KERNEL_OK")
</pallas_src>

<mosaic_0001>
module attributes {stable_mosaic.version = 11 : i64} {
  func.func @bidaf_kernel(%arg0: i32, %arg1: memref<2x8x32xf32, #tpu.memory_space<vmem>>, %arg2: memref<2x16x32xf32, #tpu.memory_space<vmem>>, %arg3: memref<2x8x1xf32, #tpu.memory_space<vmem>>, %arg4: memref<2x1x16xf32, #tpu.memory_space<vmem>>, %arg5: memref<1x32xf32, #tpu.memory_space<vmem>>, %arg6: memref<1x32xf32, #tpu.memory_space<vmem>>, %arg7: memref<1x32xf32, #tpu.memory_space<vmem>>, %arg8: memref<1x1xf32, #tpu.memory_space<smem>>, %arg9: memref<2x8x128xf32, #tpu.memory_space<vmem>>) attributes {dimension_semantics = [#tpu.dimension_semantics<parallel>], iteration_bounds = array<i64: 1>, scalar_prefetch = 0 : i64, scratch_operands = 0 : i64, tpu.core_type = #tpu.core_type<tc>, window_params = [{transform_indices = @transform_0, window_bounds = array<i64: 2, 8, 32>}, {transform_indices = @transform_1, window_bounds = array<i64: 2, 16, 32>}, {transform_indices = @transform_2, window_bounds = array<i64: 2, 8, 1>}, {transform_indices = @transform_3, window_bounds = array<i64: 2, 1, 16>}, {pipeline_mode = #tpu.pipeline_mode<synchronous>, transform_indices = @transform_4, window_bounds = array<i64: 1, 32>}, {pipeline_mode = #tpu.pipeline_mode<synchronous>, transform_indices = @transform_5, window_bounds = array<i64: 1, 32>}, {pipeline_mode = #tpu.pipeline_mode<synchronous>, transform_indices = @transform_6, window_bounds = array<i64: 1, 32>}, {transform_indices = @transform_7, window_bounds = array<i64: 1, 1>}, {transform_indices = @transform_8, window_bounds = array<i64: 2, 8, 128>}]} {
    %c0 = arith.constant 0 : index
    %c0_0 = arith.constant 0 : index
    %c0_1 = arith.constant 0 : index
    %0 = vector.load %arg1[%c0, %c0_0, %c0_1] : memref<2x8x32xf32, #tpu.memory_space<vmem>>, vector<2x8x32xf32>
    %c0_2 = arith.constant 0 : index
    %c0_3 = arith.constant 0 : index
    %c0_4 = arith.constant 0 : index
    %1 = vector.load %arg2[%c0_2, %c0_3, %c0_4] : memref<2x16x32xf32, #tpu.memory_space<vmem>>, vector<2x16x32xf32>
    %2 = arith.truncf %1 : vector<2x16x32xf32> to vector<2x16x32xbf16>
    %c0_5 = arith.constant 0 : index
    %c0_6 = arith.constant 0 : index
    %c0_7 = arith.constant 0 : index
    %3 = vector.load %arg3[%c0_5, %c0_6, %c0_7] : memref<2x8x1xf32, #tpu.memory_space<vmem>>, vector<2x8x1xf32>
    %c0_8 = arith.constant 0 : index
    %c0_9 = arith.constant 0 : index
    %c0_10 = arith.constant 0 : index
    %4 = vector.load %arg4[%c0_8, %c0_9, %c0_10] : memref<2x1x16xf32, #tpu.memory_space<vmem>>, vector<2x1x16xf32>
    %c0_11 = arith.constant 0 : index
    %c0_12 = arith.constant 0 : index
    %5 = vector.load %arg5[%c0_11, %c0_12] : memref<1x32xf32, #tpu.memory_space<vmem>>, vector<1x32xf32>
    %c0_13 = arith.constant 0 : index
    %c0_14 = arith.constant 0 : index
    %6 = vector.load %arg6[%c0_13, %c0_14] : memref<1x32xf32, #tpu.memory_space<vmem>>, vector<1x32xf32>
    %c0_15 = arith.constant 0 : index
    %c0_16 = arith.constant 0 : index
    %7 = vector.load %arg7[%c0_15, %c0_16] : memref<1x32xf32, #tpu.memory_space<vmem>>, vector<1x32xf32>
    %c0_17 = arith.constant 0 : index
    %c0_18 = arith.constant 0 : index
    %8 = memref.load %arg8[%c0_17, %c0_18] : memref<1x1xf32, #tpu.memory_space<smem>>
    %9 = vector.shape_cast %5 : vector<1x32xf32> to vector<1x1x32xf32>
    %10 = vector.broadcast %9 : vector<1x1x32xf32> to vector<2x8x32xf32>
    %11 = arith.mulf %0, %10 : vector<2x8x32xf32>
    %cst = arith.constant dense<0.000000e+00> : vector<2x8xf32>
    %12 = vector.multi_reduction <add>, %11, %cst [2] : vector<2x8x32xf32> to vector<2x8xf32>
    %13 = vector.shape_cast %12 : vector<2x8xf32> to vector<2x8x1xf32>
    %14 = vector.shape_cast %7 : vector<1x32xf32> to vector<1x1x32xf32>
    %15 = vector.broadcast %14 : vector<1x1x32xf32> to vector<2x8x32xf32>
    %16 = arith.mulf %0, %15 : vector<2x8x32xf32>
    %17 = vector.shape_cast %6 : vector<1x32xf32> to vector<1x1x32xf32>
    %18 = vector.broadcast %17 : vector<1x1x32xf32> to vector<2x8x32xf32>
    %19 = arith.addf %16, %18 : vector<2x8x32xf32>
    %20 = arith.truncf %19 : vector<2x8x32xf32> to vector<2x8x32xbf16>
    "tpu.trace_start"() <{level = 10 : i32, message = "bth,bmh->btm"}> : () -> ()
    %cst_19 = arith.constant dense<0.000000e+00> : vector<2x8x16xf32>
    %21 = tpu.matmul %20, %2, %cst_19 {dimension_numbers = #tpu.dot_dimension_numbers<[2], [2], [1], [1], [0, 0, 0, 1, 1, 1], [0], [0]>} : vector<2x8x32xbf16>, vector<2x16x32xbf16>, vector<2x8x16xf32> -> vector<2x8x16xf32>
    "tpu.trace_stop"() : () -> ()
    %22 = vector.broadcast %8 : f32 to vector<2x8x1xf32>
    %23 = arith.addf %13, %22 : vector<2x8x1xf32>
    %24 = vector.broadcast %23 : vector<2x8x1xf32> to vector<2x8x16xf32>
    %25 = arith.addf %21, %24 : vector<2x8x16xf32>
    %26 = vector.broadcast %4 : vector<2x1x16xf32> to vector<2x8x16xf32>
    %27 = arith.addf %25, %26 : vector<2x8x16xf32>
    %cst_20 = arith.constant dense<0xFF800000> : vector<2x8xf32>
    %28 = vector.multi_reduction <maximumf>, %27, %cst_20 [2] : vector<2x8x16xf32> to vector<2x8xf32>
    %29 = vector.shape_cast %28 : vector<2x8xf32> to vector<2x8x1xf32>
    %30 = vector.broadcast %29 : vector<2x8x1xf32> to vector<2x8x16xf32>
    %31 = arith.subf %27, %30 : vector<2x8x16xf32>
    %32 = math.exp %31 : vector<2x8x16xf32>
    %cst_21 = arith.constant dense<0.000000e+00> : vector<2x8xf32>
    %33 = vector.multi_reduction <add>, %32, %cst_21 [2] : vector<2x8x16xf32> to vector<2x8xf32>
    %34 = vector.shape_cast %33 : vector<2x8xf32> to vector<2x8x1xf32>
    %35 = tpu.reciprocal %34 {approx = true} : vector<2x8x1xf32> -> vector<2x8x1xf32>
    %36 = vector.broadcast %35 : vector<2x8x1xf32> to vector<2x8x16xf32>
    %37 = arith.mulf %32, %36 : vector<2x8x16xf32>
    %38 = vector.broadcast %3 : vector<2x8x1xf32> to vector<2x8x16xf32>
    %39 = arith.addf %25, %38 : vector<2x8x16xf32>
    %cst_22 = arith.constant dense<0xFF800000> : vector<2x16xf32>
    %40 = vector.multi_reduction <maximumf>, %39, %cst_22 [1] : vector<2x8x16xf32> to vector<2x16xf32>
    %41 = vector.shape_cast %40 : vector<2x16xf32> to vector<2x1x16xf32>
    %42 = vector.broadcast %41 : vector<2x1x16xf32> to vector<2x8x16xf32>
    %43 = arith.subf %39, %42 : vector<2x8x16xf32>
    %44 = math.exp %43 : vector<2x8x16xf32>
    %cst_23 = arith.constant dense<0.000000e+00> : vector<2x16xf32>
    %45 = vector.multi_reduction <add>, %44, %cst_23 [1] : vector<2x8x16xf32> to vector<2x16xf32>
    %46 = vector.shape_cast %45 : vector<2x16xf32> to vector<2x1x16xf32>
    %47 = tpu.reciprocal %46 {approx = true} : vector<2x1x16xf32> -> vector<2x1x16xf32>
    %48 = vector.broadcast %47 : vector<2x1x16xf32> to vector<2x8x16xf32>
    %49 = arith.mulf %44, %48 : vector<2x8x16xf32>
    %50 = arith.truncf %37 : vector<2x8x16xf32> to vector<2x8x16xbf16>
    "tpu.trace_start"() <{level = 10 : i32, message = "btm,bmh->bth"}> : () -> ()
    %cst_24 = arith.constant dense<0.000000e+00> : vector<2x8x32xf32>
    %51 = tpu.matmul %50, %2, %cst_24 {dimension_numbers = #tpu.dot_dimension_numbers<[2], [1], [1], [2], [0, 0, 0, 1, 1, 2], [0], [0]>} : vector<2x8x16xbf16>, vector<2x16x32xbf16>, vector<2x8x32xf32> -> vector<2x8x32xf32>
    "tpu.trace_stop"() : () -> ()
    %52 = arith.truncf %49 : vector<2x8x16xf32> to vector<2x8x16xbf16>
    %53 = arith.truncf %0 : vector<2x8x32xf32> to vector<2x8x32xbf16>
    "tpu.trace_start"() <{level = 10 : i32, message = "btm,bth->bmh"}> : () -> ()
    %cst_25 = arith.constant dense<0.000000e+00> : vector<2x16x32xf32>
    %54 = tpu.matmul %52, %53, %cst_25 {dimension_numbers = #tpu.dot_dimension_numbers<[1], [1], [2], [2], [0, 0, 0, 2, 1, 2], [0], [0]>} : vector<2x8x16xbf16>, vector<2x8x32xbf16>, vector<2x16x32xf32> -> vector<2x16x32xf32>
    "tpu.trace_stop"() : () -> ()
    %55 = arith.truncf %37 : vector<2x8x16xf32> to vector<2x8x16xbf16>
    %56 = arith.truncf %54 : vector<2x16x32xf32> to vector<2x16x32xbf16>
    "tpu.trace_start"() <{level = 10 : i32, message = "btm,bmh->bth"}> : () -> ()
    %cst_26 = arith.constant dense<0.000000e+00> : vector<2x8x32xf32>
    %57 = tpu.matmul %55, %56, %cst_26 {dimension_numbers = #tpu.dot_dimension_numbers<[2], [1], [1], [2], [0, 0, 0, 1, 1, 2], [0], [0]>} : vector<2x8x16xbf16>, vector<2x16x32xbf16>, vector<2x8x32xf32> -> vector<2x8x32xf32>
    "tpu.trace_stop"() : () -> ()
    %58 = arith.mulf %0, %51 : vector<2x8x32xf32>
    %59 = arith.mulf %0, %57 : vector<2x8x32xf32>
    %60 = tpu.concatenate %0, %51, %58, %59 in 2 : vector<2x8x32xf32>, vector<2x8x32xf32>, vector<2x8x32xf32>, vector<2x8x32xf32> -> vector<2x8x128xf32>
    %c0_27 = arith.constant 0 : index
    %c0_28 = arith.constant 0 : index
    %c0_29 = arith.constant 0 : index
    %61 = vector.load %arg9[%c0_27, %c0_28, %c0_29] : memref<2x8x128xf32, #tpu.memory_space<vmem>>, vector<2x8x128xf32>
    tpu.vector_store %arg9[%c0_27, %c0_28, %c0_29], %60 {strides = array<i32>} : memref<2x8x128xf32, #tpu.memory_space<vmem>>, vector<2x8x128xf32>,
    return
  }
  func.func @transform_0(%arg0: i32) -> (i32, i32, i32) {
    %c0_i32 = arith.constant 0 : i32
    %c0_i32_0 = arith.constant 0 : i32
    %c0_i32_1 = arith.constant 0 : i32
    return %arg0, %c0_i32, %c0_i32_0 : i32, i32, i32
  }
  func.func @transform_1(%arg0: i32) -> (i32, i32, i32) {
    %c0_i32 = arith.constant 0 : i32
    %c0_i32_0 = arith.constant 0 : i32
    %c0_i32_1 = arith.constant 0 : i32
    return %arg0, %c0_i32, %c0_i32_0 : i32, i32, i32
  }
  func.func @transform_2(%arg0: i32) -> (i32, i32, i32) {
    %c0_i32 = arith.constant 0 : i32
    %c0_i32_0 = arith.constant 0 : i32
    %c0_i32_1 = arith.constant 0 : i32
    return %arg0, %c0_i32, %c0_i32_0 : i32, i32, i32
  }
  func.func @transform_3(%arg0: i32) -> (i32, i32, i32) {
    %c0_i32 = arith.constant 0 : i32
    %c0_i32_0 = arith.constant 0 : i32
    %c0_i32_1 = arith.constant 0 : i32
    return %arg0, %c0_i32, %c0_i32_0 : i32, i32, i32
  }
  func.func @transform_4(%arg0: i32) -> (i32, i32) {
    %c0_i32 = arith.constant 0 : i32
    %c0_i32_0 = arith.constant 0 : i32
    %c0_i32_1 = arith.constant 0 : i32
    return %c0_i32, %c0_i32_0 : i32, i32
  }
  func.func @transform_5(%arg0: i32) -> (i32, i32) {
    %c0_i32 = arith.constant 0 : i32
    %c0_i32_0 = arith.constant 0 : i32
    %c0_i32_1 = arith.constant 0 : i32
    return %c0_i32, %c0_i32_0 : i32, i32
  }
  func.func @transform_6(%arg0: i32) -> (i32, i32) {
    %c0_i32 = arith.constant 0 : i32
    %c0_i32_0 = arith.constant 0 : i32
    %c0_i32_1 = arith.constant 0 : i32
    return %c0_i32, %c0_i32_0 : i32, i32
  }
  func.func @transform_7(%arg0: i32) -> (i32, i32) {
    %c0_i32 = arith.constant 0 : i32
    %c0_i32_0 = arith.constant 0 : i32
    %c0_i32_1 = arith.constant 0 : i32
    return %c0_i32, %c0_i32_0 : i32, i32
  }
  func.func @transform_8(%arg0: i32) -> (i32, i32, i32) {
    %c0_i32 = arith.constant 0 : i32
    %c0_i32_0 = arith.constant 0 : i32
    %c0_i32_1 = arith.constant 0 : i32
    return %arg0, %c0_i32, %c0_i32_0 : i32, i32, i32
  }
}

</mosaic_0001>

<llo_original>
// kernel: bidaf_attention.1
$region0: #{bidaf_attention.1}
  #allocation0 [shape = 'u32[]', space=smem, size = 0x4, offset = 0x4, fixed_abs, tag = 'smem constant byte address 0x4 - core index']
  #allocation1 [shape = 'u32[144,128]{1,0:T(1,128)}', space=vmem, size = 0x12000, scoped, tag = 'internal scratch']
  #allocation2 [shape = 'f32[1,1]{1,0:T(1,128)S(6)}', space=smem, size = 0x200, scoped, tag = 'scoped memory for bidaf_attention.1']
  %s0 = inlined_call_operand.hbm [shape: f32[2,8,32], index: 0, kind: input, shape index: {}]
  %s1 = inlined_call_operand.hbm [shape: f32[2,16,32], index: 1, kind: input, shape index: {}]
  %s2 = inlined_call_operand.hbm [shape: f32[2,8,1], index: 2, kind: input, shape index: {}]
  %s3 = inlined_call_operand.hbm [shape: f32[2,1,16], index: 3, kind: input, shape index: {}]
  %s4 = inlined_call_operand.hbm [shape: f32[1,32], index: 4, kind: input, shape index: {}]
  %s5 = inlined_call_operand.hbm [shape: f32[1,32], index: 5, kind: input, shape index: {}]
  %s6 = inlined_call_operand.hbm [shape: f32[1,32], index: 6, kind: input, shape index: {}]
  %s7 = inlined_call_operand.<no memory space> [shape: f32[1,1], index: 7, kind: input, shape index: {}]
  %s8 = inlined_call_operand.hbm [shape: f32[2,8,128], index: 8, kind: output, shape index: {}]
  %s9 = sld [smem:[#allocation0]]
  $region70: #{bidaf_attention.1} parent=0
    _
  %s11 = ssub.s32 1, %s9
  %s12 = scalar_select 0, %s11, %s9
  %13 = sst [smem:[#allocation2]] %s7
  $region1: #{bidaf_attention.1} parent=0
    #allocation3 [shape = 'u8[8192]{0}', space=vmem, size = 0x2000, scoped, tag = 'input window, operand 0, single buffered']
    #allocation4 [shape = 's32[1]{0}', space=sflag, size = 0x4, scoped, tag = 'scoped memory for bidaf_attention.1']
    #allocation5 [shape = 's32[1]{0}', space=sflag, size = 0x4, scoped, tag = 'scoped memory for bidaf_attention.1']
    #allocation6 [shape = 'u8[16384]{0}', space=vmem, size = 0x4000, scoped, tag = 'input window, operand 1, single buffered']
    #allocation7 [shape = 's32[1]{0}', space=sflag, size = 0x4, scoped, tag = 'scoped memory for bidaf_attention.1']
    #allocation8 [shape = 'u8[8192]{0}', space=vmem, size = 0x2000, scoped, tag = 'input window, operand 2, single buffered']
    #allocation9 [shape = 'u8[1024]{0}', space=vmem, size = 0x400, scoped, tag = 'input window, operand 3, single buffered']
    #allocation10 [shape = 's32[1]{0}', space=sflag, size = 0x4, scoped, tag = 'scoped memory for bidaf_attention.1']
    #allocation11 [shape = 'u8[512]{0}', space=vmem, size = 0x400, scoped, tag = 'input window, operand 4, single buffered']
    #allocation12 [shape = 'u8[512]{0}', space=vmem, size = 0x400, scoped, tag = 'input window, operand 5, single buffered']
    #allocation13 [shape = 's32[1]{0}', space=sflag, size = 0x4, scoped, tag = 'scoped memory for bidaf_attention.1']
    #allocation14 [shape = 'u8[512]{0}', space=vmem, size = 0x400, scoped, tag = 'input window, operand 6, single buffered']
    #allocation15 [shape = 'u8[8192]{0}', space=vmem, size = 0x2000, scoped, tag = 'output window, operand 0, single buffered']
    %14 = vsyncpa [#allocation4], 0
    %15 = vsyncpa [#allocation7], 0
    %16 = vsyncpa [#allocation10], 0
    %17 = vsyncpa [#allocation13], 0
    %18 = vsyncpa [#allocation5], 0
    // Predicated region
    $region2: #{bidaf_attention.1} parent=1 // pred_check
      _
    $region3: #{bidaf_attention.1} parent=1 // pred_check_branch
      %20 = sbr.rel (0) target = $region5
    $region4: #{bidaf_attention.1} parent=1 // pred_region
      %s22 = ssub.s32 256, 256
      %23 = vsyncadd [#allocation4], %s22
      %s24 = sshll.u32 [#allocation3], 4
      %s25 = int_to_ptr.vmem [resolvable:$true] %s24
      %30 = dma.hbm_to_vmem [thread:$0]  %s0, 256, %s25, [#allocation4], 128, 128, 8
    $region5: #{bidaf_attention.1} parent=1 // pred_fallthru
      _
    // Predicated region
    $region6: #{bidaf_attention.1} parent=1 // pred_check
      _
    $region7: #{bidaf_attention.1} parent=1 // pred_check_branch
      %32 = sbr.rel (0) target = $region9
    $region8: #{bidaf_attention.1} parent=1 // pred_region
      %s34 = ssub.s32 512, 512
      %35 = vsyncadd [#allocation7], %s34
      %s36 = sshll.u32 [#allocation6], 4
      %s37 = int_to_ptr.vmem [resolvable:$true] %s36
      %42 = dma.hbm_to_vmem [thread:$0]  %s1, 512, %s37, [#allocation7], 128, 128, 8
    $region9: #{bidaf_attention.1} parent=1 // pred_fallthru
      _
    // Predicated region
    $region10: #{bidaf_attention.1} parent=1 // pred_check
      _
    $region11: #{bidaf_attention.1} parent=1 // pred_check_branch
      %44 = sbr.rel (0) target = $region13
    $region12: #{bidaf_attention.1} parent=1 // pred_region
      %s46 = ssub.s32 256, 256
      %47 = vsyncadd [#allocation7], %s46
      %s48 = sshll.u32 [#allocation8], 4
      %s49 = int_to_ptr.vmem [resolvable:$true] %s48
      %54 = dma.hbm_to_vmem [thread:$0]  %s2, 256, %s49, [#allocation7], 128, 128, 8
    $region13: #{bidaf_attention.1} parent=1 // pred_fallthru
      _
    // Predicated region
    $region14: #{bidaf_attention.1} parent=1 // pred_check
      _
    $region15: #{bidaf_attention.1} parent=1 // pred_check_branch
      %56 = sbr.rel (0) target = $region17
    $region16: #{bidaf_attention.1} parent=1 // pred_region
      %s58 = ssub.s32 32, 32
      %59 = vsyncadd [#allocation10], %s58
      %s60 = sshll.u32 [#allocation9], 4
      %s61 = int_to_ptr.vmem [resolvable:$true] %s60
      %66 = dma.hbm_to_vmem [thread:$0]  %s3, 32, %s61, [#allocation10], 16, 16, 1
    $region17: #{bidaf_attention.1} parent=1 // pred_fallthru
      _
    // Predicated region
    $region18: #{bidaf_attention.1} parent=1 // pred_check
      _
    $region19: #{bidaf_attention.1} parent=1 // pred_check_branch
      %68 = sbr.rel (0) target = $region21
    $region20: #{bidaf_attention.1} parent=1 // pred_region
      %s70 = ssub.s32 16, 16
      %71 = vsyncadd [#allocation10], %s70
      %s73 = sshll.u32 [#allocation11], 4
      %s74 = int_to_ptr.vmem [resolvable:$true] %s73
      %76 = dma.hbm_to_vmem [thread:$0]  %s4, 16, %s74, [#allocation10]
    $region21: #{bidaf_attention.1} parent=1 // pred_fallthru
      _
    // Predicated region
    $region22: #{bidaf_attention.1} parent=1 // pred_check
      _
    $region23: #{bidaf_attention.1} parent=1 // pred_check_branch
      %78 = sbr.rel (0) target = $region25
    $region24: #{bidaf_attention.1} parent=1 // pred_region
      %s80 = ssub.s32 16, 16
      %81 = vsyncadd [#allocation13], %s80
      %s83 = sshll.u32 [#allocation12], 4
      %s84 = int_to_ptr.vmem [resolvable:$true] %s83
      %86 = dma.hbm_to_vmem [thread:$0]  %s5, 16, %s84, [#allocation13]
    $region25: #{bidaf_attention.1} parent=1 // pred_fallthru
      _
    // Predicated region
    $region26: #{bidaf_attention.1} parent=1 // pred_check
      _
    $region27: #{bidaf_attention.1} parent=1 // pred_check_branch
      %88 = sbr.rel (0) target = $region29
    $region28: #{bidaf_attention.1} parent=1 // pred_region
      %s90 = ssub.s32 16, 16
      %91 = vsyncadd [#allocation13], %s90
      %s93 = sshll.u32 [#allocation14], 4
      %s94 = int_to_ptr.vmem [resolvable:$true] %s93
      %96 = dma.hbm_to_vmem [thread:$0]  %s6, 16, %s94, [#allocation13]
    $region29: #{bidaf_attention.1} parent=1 // pred_fallthru
      _
    // Predicated region
    $region30: #{bidaf_attention.1} parent=1 // pred_check
      _
    $region31: #{bidaf_attention.1} parent=1 // pred_check_branch
      %98 = sbr.rel (0) target = $region33
    $region32: #{bidaf_attention.1} parent=1 // pred_region
      _
    $region33: #{bidaf_attention.1} parent=1 // pred_fallthru
      _
    // Predicated region
    $region34: #{bidaf_attention.1} parent=1 // pred_check
      _
    $region35: #{bidaf_attention.1} parent=1 // pred_check_branch
      %100 = sbr.rel (0) target = $region37
    $region36: #{bidaf_attention.1} parent=1 // pred_region
      %101 = dma.done [#allocation4], 256
    $region37: #{bidaf_attention.1} parent=1 // pred_fallthru
      _
    // Predicated region
    $region38: #{bidaf_attention.1} parent=1 // pred_check
      _
    $region39: #{bidaf_attention.1} parent=1 // pred_check_branch
      %103 = sbr.rel (0) target = $region41
    $region40: #{bidaf_attention.1} parent=1 // pred_region
      %104 = dma.done [#allocation7], 512
    $region41: #{bidaf_attention.1} parent=1 // pred_fallthru
      _
    // Predicated region
    $region42: #{bidaf_attention.1} parent=1 // pred_check
      _
    $region43: #{bidaf_attention.1} parent=1 // pred_check_branch
      %106 = sbr.rel (0) target = $region45
    $region44: #{bidaf_attention.1} parent=1 // pred_region
      %107 = dma.done [#allocation7], 256
    $region45: #{bidaf_attention.1} parent=1 // pred_fallthru
      _
    // Predicated region
    $region46: #{bidaf_attention.1} parent=1 // pred_check
      _
    $region47: #{bidaf_attention.1} parent=1 // pred_check_branch
      %109 = sbr.rel (0) target = $region49
    $region48: #{bidaf_attention.1} parent=1 // pred_region
      %110 = dma.done [#allocation10], 32
    $region49: #{bidaf_attention.1} parent=1 // pred_fallthru
      _
    // Predicated region
    $region50: #{bidaf_attention.1} parent=1 // pred_check
      _
    $region51: #{bidaf_attention.1} parent=1 // pred_check_branch
      %112 = sbr.rel (0) target = $region53
    $region52: #{bidaf_attention.1} parent=1 // pred_region
      %113 = dma.done [#allocation10], 16
    $region53: #{bidaf_attention.1} parent=1 // pred_fallthru
      _
    // Predicated region
    $region54: #{bidaf_attention.1} parent=1 // pred_check
      _
    $region55: #{bidaf_attention.1} parent=1 // pred_check_branch
      %115 = sbr.rel (0) target = $region57
    $region56: #{bidaf_attention.1} parent=1 // pred_region
      %116 = dma.done [#allocation13], 16
    $region57: #{bidaf_attention.1} parent=1 // pred_fallthru
      _
    // Predicated region
    $region58: #{bidaf_attention.1} parent=1 // pred_check
      _
    $region59: #{bidaf_attention.1} parent=1 // pred_check_branch
      %118 = sbr.rel (0) target = $region61
    $region60: #{bidaf_attention.1} parent=1 // pred_region
      %119 = dma.done [#allocation13], 16
    $region61: #{bidaf_attention.1} parent=1 // pred_fallthru
      _
    %v121 = vld [vmem:[#allocation3] sm:$0xff]
    %v122 = vld [vmem:[#allocation3 + $0x8] sm:$0xff]
    %v123 = vld [vmem:[#allocation6] sm:$0xff]
    %v124 = vld [vmem:[#allocation6 + $0x8] sm:$0xff]
    %v125 = vld [vmem:[#allocation6 + $0x10] sm:$0xff]
    %v126 = vld [vmem:[#allocation6 + $0x18] sm:$0xff]
    %v127 = vpack.c.bf16 %v124, %v123
    %v128 = vpack.c.bf16 %v126, %v125
    %v129 = vld [vmem:[#allocation8] sm:$0xff]
    %v130 = vld [vmem:[#allocation8 + $0x8] sm:$0xff]
    %v131 = vld [vmem:[#allocation9] sm:$0x1]
    %v132 = vld [vmem:[#allocation9 + $0x1] sm:$0x1]
    %v133 = vld [vmem:[#allocation11] sm:$0x1]
    %v134 = vld [vmem:[#allocation12] sm:$0x1]
    %v135 = vld [vmem:[#allocation14] sm:$0x1]
    %s136 = sld [smem:[#allocation2]]
    %v138 = vlaneseq
    %v139 = vshrl.u32 %v138, 7
    %v140 = vsub.s32 0, %v139
    %v141 = vrot.slane %v133, %v140
    %v143 = vmul.f32 %v121, %v141
    %v144 = vmul.f32 %v122, %v141
    %vm145 = vcmask 261120
    %v146 = vsel %vm145, %v143, 0.0
    %147 = vadd.xlane.f32.xlu0 %v146
    %v148 = vpop.xlane.xlu0 %147
    %v149 = vsel %vm145, %v144, 0.0
    %150 = vadd.xlane.f32.xlu0 %v149
    %v151 = vpop.xlane.xlu0 %150
    %v153 = vlaneseq
    %v154 = vshrl.u32 %v153, 7
    %v155 = vsub.s32 0, %v154
    %v156 = vrot.slane %v135, %v155
    %v158 = vmul.f32 %v121, %v156
    %v159 = vmul.f32 %v122, %v156
    %v161 = vlaneseq
    %v162 = vshrl.u32 %v161, 7
    %v163 = vsub.s32 0, %v162
    %v164 = vrot.slane %v134, %v163
    %v166 = vadd.f32 %v158, %v164
    %v167 = vadd.f32 %v159, %v164
    %v168 = vpack.c.bf16 %v166, %v166
    %v169 = vpack.c.bf16 %v167, %v167
    %v170 = vstv %s136
    %v171 = vadd.f32 %v148, %v170
    %v172 = vadd.f32 %v151, %v170
    %v174 = vsel %vm145, %v168, 0
    %v177 = vsel %vm145, %v127, 0
    %179 = vmatprep.subr.bf16.mxu0 0
    %180 = vmatpush1.bf16.xpose.msra.mxu0 %v177
    %181 = vmatprep.subr.bf16.mxu0 0
    %182 = vmatpush1.bf16.xpose.msra.mxu0 0
    %183 = vmatprep.subr.bf16.mxu0 0
    %184 = vmatpush1.bf16.xpose.msra.mxu0 0
    %185 = vmatprep.subr.bf16.mxu0 0
    %186 = vmatpush1.bf16.xpose.msra.mxu0 0
    %187 = vmatprep.subr.bf16.mxu0 0
    %188 = vmatpush1.bf16.xpose.msra.mxu0 0
    %189 = vmatprep.subr.bf16.mxu0 0
    %190 = vmatpush1.bf16.xpose.msra.mxu0 0
    %191 = vmatprep.subr.bf16.mxu0 0
    %192 = vmatpush1.bf16.xpose.msra.mxu0 0
    %193 = vmatprep.subr.bf16.mxu0 0
    %194 = vmatpush1.bf16.xpose.msra.mxu0 0
    %195 = vmatprep.subr.bf16.mxu0 0
    %196 = vmatpush1.bf16.xpose.msra.mxu0 0
    %197 = vmatprep.subr.bf16.mxu0 0
    %198 = vmatpush1.bf16.xpose.msra.mxu0 0
    %199 = vmatprep.subr.bf16.mxu0 0
    %200 = vmatpush1.bf16.xpose.msra.mxu0 0
    %201 = vmatprep.subr.bf16.mxu0 0
    %202 = vmatpush1.bf16.xpose.msra.mxu0 0
    %203 = vmatprep.subr.bf16.mxu0 0
    %204 = vmatpush1.bf16.xpose.msra.mxu0 0
    %205 = vmatprep.subr.bf16.mxu0 0
    %206 = vmatpush1.bf16.xpose.msra.mxu0 0
    %207 = vmatprep.subr.bf16.mxu0 0
    %208 = vmatpush1.bf16.xpose.msra.mxu0 0
    %209 = vmatprep.subr.bf16.mxu0 0
    %210 = vmatpush1.bf16.xpose.msra.mxu0 0
    %211 = vmatprep.mubr.bf16.mxu0 0
    %212 = vmatmul.mubr.bf16.gmra.mrb[0].mxu0 %v174
    %v213 = vpop.f32.mrb[0].mxu0
    %v214 = vadd.f32 %v171, %v213
    %v215 = vpop.f32.mrb[0].mxu0
    %v216 = vpop.f32.mrb[0].mxu0
    %v217 = vpop.f32.mrb[0].mxu0
    %218 = vdwg.mxu0
    %v220 = vsel %vm145, %v169, 0
    %v223 = vsel %vm145, %v128, 0
    %225 = vmatprep.subr.bf16.mxu0 0
    %226 = vmatpush1.bf16.xpose.msra.mxu0 %v223
    %227 = vmatprep.subr.bf16.mxu0 0
    %228 = vmatpush1.bf16.xpose.msra.mxu0 0
    %229 = vmatprep.subr.bf16.mxu0 0
    %230 = vmatpush1.bf16.xpose.msra.mxu0 0
    %231 = vmatprep.subr.bf16.mxu0 0
    %232 = vmatpush1.bf16.xpose.msra.mxu0 0
    %233 = vmatprep.subr.bf16.mxu0 0
    %234 = vmatpush1.bf16.xpose.msra.mxu0 0
    %235 = vmatprep.subr.bf16.mxu0 0
    %236 = vmatpush1.bf16.xpose.msra.mxu0 0
    %237 = vmatprep.subr.bf16.mxu0 0
    %238 = vmatpush1.bf16.xpose.msra.mxu0 0
    %239 = vmatprep.subr.bf16.mxu0 0
    %240 = vmatpush1.bf16.xpose.msra.mxu0 0
    %241 = vmatprep.subr.bf16.mxu0 0
    %242 = vmatpush1.bf16.xpose.msra.mxu0 0
    %243 = vmatprep.subr.bf16.mxu0 0
    %244 = vmatpush1.bf16.xpose.msra.mxu0 0
    %245 = vmatprep.subr.bf16.mxu0 0
    %246 = vmatpush1.bf16.xpose.msra.mxu0 0
    %247 = vmatprep.subr.bf16.mxu0 0
    %248 = vmatpush1.bf16.xpose.msra.mxu0 0
    %249 = vmatprep.subr.bf16.mxu0 0
    %250 = vmatpush1.bf16.xpose.msra.mxu0 0
    %251 = vmatprep.subr.bf16.mxu0 0
    %252 = vmatpush1.bf16.xpose.msra.mxu0 0
    %253 = vmatprep.subr.bf16.mxu0 0
    %254 = vmatpush1.bf16.xpose.msra.mxu0 0
    %255 = vmatprep.subr.bf16.mxu0 0
    %256 = vmatpush1.bf16.xpose.msra.mxu0 0
    %257 = vmatprep.mubr.bf16.mxu0 0
    %258 = vmatmul.mubr.bf16.gmra.mrb[0].mxu0 %v220
    %v259 = vpop.f32.mrb[0].mxu0
    %v260 = vadd.f32 %v172, %v259
    %v261 = vpop.f32.mrb[0].mxu0
    %v262 = vpop.f32.mrb[0].mxu0
    %v263 = vpop.f32.mrb[0].mxu0
    %264 = vdwg.mxu0
    %v267 = vlaneseq
    %v268 = vshrl.u32 %v267, 7
    %v269 = vsub.s32 0, %v268
    %v270 = vrot.slane %v131, %v269
    %v271 = vlaneseq
    %v272 = vshrl.u32 %v271, 7
    %v273 = vsub.s32 0, %v272
    %v274 = vrot.slane %v132, %v273
    %v277 = vadd.f32 %v214, %v270
    %v278 = vadd.f32 %v260, %v274
    %vm279 = vcmask 130048
    %v280 = vsel %vm279, %v277, -inf
    %281 = vmax.xlane.f32.xlu0 %v280
    %v282 = vpop.xlane.xlu0 %281
    %v283 = vsel %vm279, %v278, -inf
    %284 = vmax.xlane.f32.xlu0 %v283
    %v285 = vpop.xlane.xlu0 %284
    %v286 = vsub.f32 %v277, %v282
    %v287 = vsub.f32 %v278, %v285
    %v288 = vmul.f32 %v286, 1.442695
    %v289 = vpow.pop %v288
    %v290 = vmul.f32 %v287, 1.442695
    %v291 = vpow.pop %v290
    %v292 = vsel %vm279, %v289, 0.0
    %293 = vadd.xlane.f32.xlu0 %v292
    %v294 = vpop.xlane.xlu0 %293
    %v295 = vsel %vm279, %v291, 0.0
    %296 = vadd.xlane.f32.xlu0 %v295
    %v297 = vpop.xlane.xlu0 %296
    %v298 = vrcp.pop %v294
    %v299 = vrcp.pop %v297
    %v300 = vmul.f32 %v289, %v298
    %v301 = vmul.f32 %v291, %v299
    %303 = vset.pattern.permute.xlu0 0
    %304 = vperm.xlu0 %303, %v129
    %v305 = vpop.permute.xlu0 %304
    %308 = vset.pattern.permute.xlu0 0
    %309 = vperm.xlu0 %308, %v130
    %v310 = vpop.permute.xlu0 %309
    %v312 = vadd.f32 %v214, %v305
    %v313 = vadd.f32 %v260, %v310
    %v314 = vsel %vm279, %v312, -inf
    %v315 = vrot.slane %v314, 4
    %v316 = vmax.f32 %v314, %v315
    %v317 = vrot.slane %v316, 2
    %v318 = vmax.f32 %v316, %v317
    %v319 = vrot.slane %v318, 1
    %v320 = vmax.f32 %v318, %v319
    %v321 = vsel %vm279, %v313, -inf
    %v322 = vrot.slane %v321, 4
    %v323 = vmax.f32 %v321, %v322
    %v324 = vrot.slane %v323, 2
    %v325 = vmax.f32 %v323, %v324
    %v326 = vrot.slane %v325, 1
    %v327 = vmax.f32 %v325, %v326
    %v328 = vsub.f32 %v312, %v320
    %v329 = vsub.f32 %v313, %v327
    %v330 = vmul.f32 %v328, 1.442695
    %v331 = vpow.pop %v330
    %v332 = vmul.f32 %v329, 1.442695
    %v333 = vpow.pop %v332
    %v334 = vsel %vm279, %v331, 0.0
    %v335 = vrot.slane %v334, 4
    %v336 = vadd.f32 %v334, %v335
    %v337 = vrot.slane %v336, 2
    %v338 = vadd.f32 %v336, %v337
    %v339 = vrot.slane %v338, 1
    %v340 = vadd.f32 %v338, %v339
    %v341 = vsel %vm279, %v333, 0.0
    %v342 = vrot.slane %v341, 4
    %v343 = vadd.f32 %v341, %v342
    %v344 = vrot.slane %v343, 2
    %v345 = vadd.f32 %v343, %v344
    %v346 = vrot.slane %v345, 1
    %v347 = vadd.f32 %v345, %v346
    %v348 = vrcp.pop %v340
    %v349 = vrcp.pop %v347
    %v350 = vmul.f32 %v331, %v348
    %v351 = vmul.f32 %v333, %v349
    %v352 = vpack.c.bf16 %v300, %v300
    %v353 = vpack.c.bf16 %v301, %v301
    %v355 = vsel %vm279, %v352, 0
    %357 = vmatprep.subr.bf16.mxu0 0
    %358 = vmatpush1.bf16.msra.mxu0 %v127
    %359 = vmatprep.subr.bf16.mxu0 0
    %360 = vmatpush1.bf16.msra.mxu0 0
    %361 = vmatprep.subr.bf16.mxu0 0
    %362 = vmatpush1.bf16.msra.mxu0 0
    %363 = vmatprep.subr.bf16.mxu0 0
    %364 = vmatpush1.bf16.msra.mxu0 0
    %365 = vmatprep.subr.bf16.mxu0 0
    %366 = vmatpush1.bf16.msra.mxu0 0
    %367 = vmatprep.subr.bf16.mxu0 0
    %368 = vmatpush1.bf16.msra.mxu0 0
    %369 = vmatprep.subr.bf16.mxu0 0
    %370 = vmatpush1.bf16.msra.mxu0 0
    %371 = vmatprep.subr.bf16.mxu0 0
    %372 = vmatpush1.bf16.msra.mxu0 0
    %373 = vmatprep.subr.bf16.mxu0 0
    %374 = vmatpush1.bf16.msra.mxu0 0
    %375 = vmatprep.subr.bf16.mxu0 0
    %376 = vmatpush1.bf16.msra.mxu0 0
    %377 = vmatprep.subr.bf16.mxu0 0
    %378 = vmatpush1.bf16.msra.mxu0 0
    %379 = vmatprep.subr.bf16.mxu0 0
    %380 = vmatpush1.bf16.msra.mxu0 0
    %381 = vmatprep.subr.bf16.mxu0 0
    %382 = vmatpush1.bf16.msra.mxu0 0
    %383 = vmatprep.subr.bf16.mxu0 0
    %384 = vmatpush1.bf16.msra.mxu0 0
    %385 = vmatprep.subr.bf16.mxu0 0
    %386 = vmatpush1.bf16.msra.mxu0 0
    %387 = vmatprep.subr.bf16.mxu0 0
    %388 = vmatpush1.bf16.msra.mxu0 0
    %389 = vmatprep.mubr.bf16.mxu0 0
    %390 = vmatmul.mubr.bf16.gmra.mrb[0].mxu0 %v355
    %v391 = vpop.f32.mrb[0].mxu0
    %v392 = vadd.f32 0.0, %v391
    %v393 = vpop.f32.mrb[0].mxu0
    %v394 = vpop.f32.mrb[0].mxu0
    %v395 = vpop.f32.mrb[0].mxu0
    %396 = vdwg.mxu0
    %v398 = vsel %vm279, %v353, 0
    %400 = vmatprep.subr.bf16.mxu0 0
    %401 = vmatpush1.bf16.msra.mxu0 %v128
    %402 = vmatprep.subr.bf16.mxu0 0
    %403 = vmatpush1.bf16.msra.mxu0 0
    %404 = vmatprep.subr.bf16.mxu0 0
    %405 = vmatpush1.bf16.msra.mxu0 0
    %406 = vmatprep.subr.bf16.mxu0 0
    %407 = vmatpush1.bf16.msra.mxu0 0
    %408 = vmatprep.subr.bf16.mxu0 0
    %409 = vmatpush1.bf16.msra.mxu0 0
    %410 = vmatprep.subr.bf16.mxu0 0
    %411 = vmatpush1.bf16.msra.mxu0 0
    %412 = vmatprep.subr.bf16.mxu0 0
    %413 = vmatpush1.bf16.msra.mxu0 0
    %414 = vmatprep.subr.bf16.mxu0 0
    %415 = vmatpush1.bf16.msra.mxu0 0
    %416 = vmatprep.subr.bf16.mxu0 0
    %417 = vmatpush1.bf16.msra.mxu0 0
    %418 = vmatprep.subr.bf16.mxu0 0
    %419 = vmatpush1.bf16.msra.mxu0 0
    %420 = vmatprep.subr.bf16.mxu0 0
    %421 = vmatpush1.bf16.msra.mxu0 0
    %422 = vmatprep.subr.bf16.mxu0 0
    %423 = vmatpush1.bf16.msra.mxu0 0
    %424 = vmatprep.subr.bf16.mxu0 0
    %425 = vmatpush1.bf16.msra.mxu0 0
    %426 = vmatprep.subr.bf16.mxu0 0
    %427 = vmatpush1.bf16.msra.mxu0 0
    %428 = vmatprep.subr.bf16.mxu0 0
    %429 = vmatpush1.bf16.msra.mxu0 0
    %430 = vmatprep.subr.bf16.mxu0 0
    %431 = vmatpush1.bf16.msra.mxu0 0
    %432 = vmatprep.mubr.bf16.mxu0 0
    %433 = vmatmul.mubr.bf16.gmra.mrb[0].mxu0 %v398
    %v434 = vpop.f32.mrb[0].mxu0
    %v435 = vadd.f32 0.0, %v434
    %v436 = vpop.f32.mrb[0].mxu0
    %v437 = vpop.f32.mrb[0].mxu0
    %v438 = vpop.f32.mrb[0].mxu0
    %439 = vdwg.mxu0
    %v440 = vpack.c.bf16 %v350, %v350
    %v441 = vpack.c.bf16 %v351, %v351
    %v442 = vpack.c.bf16 %v121, %v121
    %v443 = vpack.c.bf16 %v122, %v122
    %444 = vxpose.xlu0.c.b16.start [1/8] %v440, 128
    %445 = vxpose.xlu0.c.b16.cont [2/8] 0, 128
    %446 = vxpose.xlu0.c.b16.cont [3/8] 0, 128
    %447 = vxpose.xlu0.c.b16.cont [4/8] 0, 128
    %448 = vxpose.xlu0.c.b16.cont [5/8] 0, 128
    %449 = vxpose.xlu0.c.b16.cont [6/8] 0, 128
    %450 = vxpose.xlu0.c.b16.cont [7/8] 0, 128
    %451 = vxpose.xlu0.c.b16.end [8/8] 0, 128
    %v452 = vpop.trf.xlu0
    %v453 = vpop.trf.xlu0
    %v454 = vpop.trf.xlu0
    %v455 = vpop.trf.xlu0
    %v456 = vpop.trf.xlu0
    %v457 = vpop.trf.xlu0
    %v458 = vpop.trf.xlu0
    %v459 = vpop.trf.xlu0
    %vm460 = vcmask 64512
    %v462 = vsel %vm460, %v452, 0
    %vm464 = vcmask 1043456
    %v466 = vsel %vm464, %v442, 0
    %468 = vmatprep.subr.bf16.mxu0 0
    %469 = vmatpush1.bf16.msra.mxu0 %v466
    %470 = vmatprep.subr.bf16.mxu0 0
    %471 = vmatpush1.bf16.msra.mxu0 0
    %472 = vmatprep.subr.bf16.mxu0 0
    %473 = vmatpush1.bf16.msra.mxu0 0
    %474 = vmatprep.subr.bf16.mxu0 0
    %475 = vmatpush1.bf16.msra.mxu0 0
    %476 = vmatprep.subr.bf16.mxu0 0
    %477 = vmatpush1.bf16.msra.mxu0 0
    %478 = vmatprep.subr.bf16.mxu0 0
    %479 = vmatpush1.bf16.msra.mxu0 0
    %480 = vmatprep.subr.bf16.mxu0 0
    %481 = vmatpush1.bf16.msra.mxu0 0
    %482 = vmatprep.subr.bf16.mxu0 0
    %483 = vmatpush1.bf16.msra.mxu0 0
    %484 = vmatprep.subr.bf16.mxu0 0
    %485 = vmatpush1.bf16.msra.mxu0 0
    %486 = vmatprep.subr.bf16.mxu0 0
    %487 = vmatpush1.bf16.msra.mxu0 0
    %488 = vmatprep.subr.bf16.mxu0 0
    %489 = vmatpush1.bf16.msra.mxu0 0
    %490 = vmatprep.subr.bf16.mxu0 0
    %491 = vmatpush1.bf16.msra.mxu0 0
    %492 = vmatprep.subr.bf16.mxu0 0
    %493 = vmatpush1.bf16.msra.mxu0 0
    %494 = vmatprep.subr.bf16.mxu0 0
    %495 = vmatpush1.bf16.msra.mxu0 0
    %496 = vmatprep.subr.bf16.mxu0 0
    %497 = vmatpush1.bf16.msra.mxu0 0
    %498 = vmatprep.subr.bf16.mxu0 0
    %499 = vmatpush1.bf16.msra.mxu0 0
    %500 = vmatprep.mubr.bf16.mxu0 0
    %501 = vmatmul.mubr.bf16.gmra.mrb[0].mxu0 %v462
    %v502 = vpop.f32.mrb[0].mxu0
    %v503 = vadd.f32 0.0, %v502
    %v504 = vpop.f32.mrb[0].mxu0
    %v505 = vpop.f32.mrb[0].mxu0
    %v506 = vadd.f32 0.0, %v505
    %v507 = vpop.f32.mrb[0].mxu0
    %508 = vdwg.mxu0
    %509 = vxpose.xlu0.c.b16.start [1/8] %v441, 128
    %510 = vxpose.xlu0.c.b16.cont [2/8] 0, 128
    %511 = vxpose.xlu0.c.b16.cont [3/8] 0, 128
    %512 = vxpose.xlu0.c.b16.cont [4/8] 0, 128
    %513 = vxpose.xlu0.c.b16.cont [5/8] 0, 128
    %514 = vxpose.xlu0.c.b16.cont [6/8] 0, 128
    %515 = vxpose.xlu0.c.b16.cont [7/8] 0, 128
    %516 = vxpose.xlu0.c.b16.end [8/8] 0, 128
    %v517 = vpop.trf.xlu0
    %v518 = vpop.trf.xlu0
    %v519 = vpop.trf.xlu0
    %v520 = vpop.trf.xlu0
    %v521 = vpop.trf.xlu0
    %v522 = vpop.trf.xlu0
    %v523 = vpop.trf.xlu0
    %v524 = vpop.trf.xlu0
    %v526 = vsel %vm460, %v517, 0
    %v529 = vsel %vm464, %v443, 0
    %531 = vmatprep.subr.bf16.mxu0 0
    %532 = vmatpush1.bf16.msra.mxu0 %v529
    %533 = vmatprep.subr.bf16.mxu0 0
    %534 = vmatpush1.bf16.msra.mxu0 0
    %535 = vmatprep.subr.bf16.mxu0 0
    %536 = vmatpush1.bf16.msra.mxu0 0
    %537 = vmatprep.subr.bf16.mxu0 0
    %538 = vmatpush1.bf16.msra.mxu0 0
    %539 = vmatprep.subr.bf16.mxu0 0
    %540 = vmatpush1.bf16.msra.mxu0 0
    %541 = vmatprep.subr.bf16.mxu0 0
    %542 = vmatpush1.bf16.msra.mxu0 0
    %543 = vmatprep.subr.bf16.mxu0 0
    %544 = vmatpush1.bf16.msra.mxu0 0
    %545 = vmatprep.subr.bf16.mxu0 0
    %546 = vmatpush1.bf16.msra.mxu0 0
    %547 = vmatprep.subr.bf16.mxu0 0
    %548 = vmatpush1.bf16.msra.mxu0 0
    %549 = vmatprep.subr.bf16.mxu0 0
    %550 = vmatpush1.bf16.msra.mxu0 0
    %551 = vmatprep.subr.bf16.mxu0 0
    %552 = vmatpush1.bf16.msra.mxu0 0
    %553 = vmatprep.subr.bf16.mxu0 0
    %554 = vmatpush1.bf16.msra.mxu0 0
    %555 = vmatprep.subr.bf16.mxu0 0
    %556 = vmatpush1.bf16.msra.mxu0 0
    %557 = vmatprep.subr.bf16.mxu0 0
    %558 = vmatpush1.bf16.msra.mxu0 0
    %559 = vmatprep.subr.bf16.mxu0 0
    %560 = vmatpush1.bf16.msra.mxu0 0
    %561 = vmatprep.subr.bf16.mxu0 0
    %562 = vmatpush1.bf16.msra.mxu0 0
    %563 = vmatprep.mubr.bf16.mxu0 0
    %564 = vmatmul.mubr.bf16.gmra.mrb[0].mxu0 %v526
    %v565 = vpop.f32.mrb[0].mxu0
    %v566 = vadd.f32 0.0, %v565
    %v567 = vpop.f32.mrb[0].mxu0
    %v568 = vpop.f32.mrb[0].mxu0
    %v569 = vadd.f32 0.0, %v568
    %v570 = vpop.f32.mrb[0].mxu0
    %571 = vdwg.mxu0
    %v572 = vpack.c.bf16 %v506, %v503
    %v573 = vpack.c.bf16 %v569, %v566
    %574 = vmatprep.subr.bf16.mxu0 0
    %575 = vmatpush1.bf16.msra.mxu0 %v572
    %576 = vmatprep.subr.bf16.mxu0 0
    %577 = vmatpush1.bf16.msra.mxu0 0
    %578 = vmatprep.subr.bf16.mxu0 0
    %579 = vmatpush1.bf16.msra.mxu0 0
    %580 = vmatprep.subr.bf16.mxu0 0
    %581 = vmatpush1.bf16.msra.mxu0 0
    %582 = vmatprep.subr.bf16.mxu0 0
    %583 = vmatpush1.bf16.msra.mxu0 0
    %584 = vmatprep.subr.bf16.mxu0 0
    %585 = vmatpush1.bf16.msra.mxu0 0
    %586 = vmatprep.subr.bf16.mxu0 0
    %587 = vmatpush1.bf16.msra.mxu0 0
    %588 = vmatprep.subr.bf16.mxu0 0
    %589 = vmatpush1.bf16.msra.mxu0 0
    %590 = vmatprep.subr.bf16.mxu0 0
    %591 = vmatpush1.bf16.msra.mxu0 0
    %592 = vmatprep.subr.bf16.mxu0 0
    %593 = vmatpush1.bf16.msra.mxu0 0
    %594 = vmatprep.subr.bf16.mxu0 0
    %595 = vmatpush1.bf16.msra.mxu0 0
    %596 = vmatprep.subr.bf16.mxu0 0
    %597 = vmatpush1.bf16.msra.mxu0 0
    %598 = vmatprep.subr.bf16.mxu0 0
    %599 = vmatpush1.bf16.msra.mxu0 0
    %600 = vmatprep.subr.bf16.mxu0 0
    %601 = vmatpush1.bf16.msra.mxu0 0
    %602 = vmatprep.subr.bf16.mxu0 0
    %603 = vmatpush1.bf16.msra.mxu0 0
    %604 = vmatprep.subr.bf16.mxu0 0
    %605 = vmatpush1.bf16.msra.mxu0 0
    %606 = vmatprep.mubr.bf16.mxu0 0
    %607 = vmatmul.mubr.bf16.gmra.mrb[0].mxu0 %v355
    %v608 = vpop.f32.mrb[0].mxu0
    %v609 = vadd.f32 0.0, %v608
    %v610 = vpop.f32.mrb[0].mxu0
    %v611 = vpop.f32.mrb[0].mxu0
    %v612 = vpop.f32.mrb[0].mxu0
    %613 = vdwg.mxu0
    %614 = vmatprep.subr.bf16.mxu0 0
    %615 = vmatpush1.bf16.msra.mxu0 %v573
    %616 = vmatprep.subr.bf16.mxu0 0
    %617 = vmatpush1.bf16.msra.mxu0 0
    %618 = vmatprep.subr.bf16.mxu0 0
    %619 = vmatpush1.bf16.msra.mxu0 0
    %620 = vmatprep.subr.bf16.mxu0 0
    %621 = vmatpush1.bf16.msra.mxu0 0
    %622 = vmatprep.subr.bf16.mxu0 0
    %623 = vmatpush1.bf16.msra.mxu0 0
    %624 = vmatprep.subr.bf16.mxu0 0
    %625 = vmatpush1.bf16.msra.mxu0 0
    %626 = vmatprep.subr.bf16.mxu0 0
    %627 = vmatpush1.bf16.msra.mxu0 0
    %628 = vmatprep.subr.bf16.mxu0 0
    %629 = vmatpush1.bf16.msra.mxu0 0
    %630 = vmatprep.subr.bf16.mxu0 0
    %631 = vmatpush1.bf16.msra.mxu0 0
    %632 = vmatprep.subr.bf16.mxu0 0
    %633 = vmatpush1.bf16.msra.mxu0 0
    %634 = vmatprep.subr.bf16.mxu0 0
    %635 = vmatpush1.bf16.msra.mxu0 0
    %636 = vmatprep.subr.bf16.mxu0 0
    %637 = vmatpush1.bf16.msra.mxu0 0
    %638 = vmatprep.subr.bf16.mxu0 0
    %639 = vmatpush1.bf16.msra.mxu0 0
    %640 = vmatprep.subr.bf16.mxu0 0
    %641 = vmatpush1.bf16.msra.mxu0 0
    %642 = vmatprep.subr.bf16.mxu0 0
    %643 = vmatpush1.bf16.msra.mxu0 0
    %644 = vmatprep.subr.bf16.mxu0 0
    %645 = vmatpush1.bf16.msra.mxu0 0
    %646 = vmatprep.mubr.bf16.mxu0 0
    %647 = vmatmul.mubr.bf16.gmra.mrb[0].mxu0 %v398
    %v648 = vpop.f32.mrb[0].mxu0
    %v649 = vadd.f32 0.0, %v648
    %v650 = vpop.f32.mrb[0].mxu0
    %v651 = vpop.f32.mrb[0].mxu0
    %v652 = vpop.f32.mrb[0].mxu0
    %653 = vdwg.mxu0
    %v654 = vmul.f32 %v121, %v392
    %v655 = vmul.f32 %v122, %v435
    %v656 = vmul.f32 %v121, %v609
    %v657 = vmul.f32 %v122, %v649
    %660 = vrot.lane.b32.xlu0 %v392, 32
    %v661 = vpop.permute.xlu0 %660
    %662 = vrot.lane.b32.xlu0 %v435, 32
    %v663 = vpop.permute.xlu0 %662
    %668 = vrot.lane.b32.xlu0 %v654, 64
    %v669 = vpop.permute.xlu0 %668
    %670 = vrot.lane.b32.xlu0 %v655, 64
    %v671 = vpop.permute.xlu0 %670
    %676 = vrot.lane.b32.xlu0 %v656, 96
    %v677 = vpop.permute.xlu0 %676
    %678 = vrot.lane.b32.xlu0 %v657, 96
    %v679 = vpop.permute.xlu0 %678
    %v682 = vsel %vm145, %v121, %v661
    %v683 = vsel %vm145, %v122, %v663
    %vm684 = vcmask 523264
    %v685 = vsel %vm684, %v682, %v669
    %v686 = vsel %vm684, %v683, %v671
    %vm687 = vcmask 785408
    %v688 = vsel %vm687, %v685, %v677
    %v689 = vsel %vm687, %v686, %v679
    %690 = vst [vmem:[#allocation15] sm:$0xff] %v688
    %691 = vst [vmem:[#allocation15 + $0x8] sm:$0xff] %v689
    // Predicated region
    $region62: #{bidaf_attention.1} parent=1 // pred_check
      _
    $region63: #{bidaf_attention.1} parent=1 // pred_check_branch
      %693 = sbr.rel (0) target = $region65
    $region64: #{bidaf_attention.1} parent=1 // pred_region
      %s695 = ssub.s32 256, 256
      %696 = vsyncadd [#allocation5], %s695
      %s697 = sshll.u32 [#allocation15], 4
      %s698 = int_to_ptr.vmem [resolvable:$true] %s697
      %703 = dma.vmem_to_hbm [thread:$0]  %s698, 256, %s8, [#allocation5], 128, 128, 8
    $region65: #{bidaf_attention.1} parent=1 // pred_fallthru
      _
    // Predicated region
    $region66: #{bidaf_attention.1} parent=1 // pred_check
      _
    $region67: #{bidaf_attention.1} parent=1 // pred_check_branch
      %705 = sbr.rel (0) target = $region69
    $region68: #{bidaf_attention.1} parent=1 // pred_region
      %706 = dma.done [#allocation5], 256
    $region69: #{bidaf_attention.1} parent=1 // pred_fallthru
      _
    %707 = vsyncpa [#allocation4], 1
    %708 = vsyncpa [#allocation7], 1
    %709 = vsyncpa [#allocation10], 1
    %710 = vsyncpa [#allocation13], 1
    %711 = vsyncpa [#allocation5], 1

</llo_original>
